<compile_context>
chip_gen: v6e
topology: v6e:2x2x1
jax: 0.10.0
libtpu: 0.0.40
codegen_flags: <defaults>
</compile_context>

<pallas_src>
import functools

import jax
import jax.numpy as jnp
from jax.experimental import pallas as pl
from jax.experimental.pallas import tpu as pltpu

D_MODEL = 512
_NEG_BIG = -1e30  # effectively -inf for padded vocab columns (finite => no NaNs)


def _round_up(a, b):
    return (a + b - 1) // b * b


def _generator_kernel(x_ref, w_ref, b_ref, o_ref, stage_ref, m_ref, l_ref,
                      *, tv, nv):
    # x_ref: (tm, 512) bf16    w_ref: (512, tv) bf16    b_ref: (1, tv) f32
    # o_ref: (tm, Vp)  f32  (resident across the V grid axis)
    # stage_ref: (nv, tm, tv) f32 raw-logit staging
    # m_ref, l_ref: (tm, 1) f32 running max / running sum-exp
    j = pl.program_id(1)

    @pl.when(j == 0)
    def _init():
        m_ref[...] = jnp.full_like(m_ref, -jnp.inf)
        l_ref[...] = jnp.zeros_like(l_ref)

    # (tm, tv) logits block: bf16 MXU matmul, f32 accumulation, f32 bias add.
    s = jnp.dot(x_ref[...], w_ref[...], preferred_element_type=jnp.float32)
    s = s + b_ref[...]

    # Stage raw logits for this V tile (dynamic index on the leading dim only).
    stage_ref[j] = s

    # Online logsumexp update.
    m_prev = m_ref[...]
    m_new = jnp.maximum(m_prev, jnp.max(s, axis=-1, keepdims=True))
    alpha = jnp.exp(m_prev - m_new)
    l_ref[...] = alpha * l_ref[...] + jnp.sum(jnp.exp(s - m_new), axis=-1,
                                              keepdims=True)
    m_ref[...] = m_new

    @pl.when(j == nv - 1)
    def _finalize():
        lse = m_ref[...] + jnp.log(l_ref[...])
        for jj in range(nv):  # static unroll; static, lane-aligned slices
            o_ref[:, jj * tv:(jj + 1) * tv] = stage_ref[jj] - lse


@functools.partial(jax.jit, static_argnames=("tm", "tv"))
def generator_forward(x, w, b, *, tm=128, tv=1024):
    """x: [B, S, 512]; w: [512, V] (transposed torch weight); b: [V].

    Returns log-probabilities [B, S, V] in float32.
    """
    B, S, D = x.shape
    assert D == D_MODEL
    V = w.shape[1]
    M = B * S

    # Tile sizes: clamp to the (padded) problem so tiny shapes stay tiny.
    tm = min(_round_up(tm, 8), _round_up(M, 8))
    Mp = _round_up(M, tm)
    vp0 = _round_up(V, 128)
    tv = min(_round_up(tv, 128), vp0)
    Vp = _round_up(vp0, tv)
    nv = Vp // tv

    # bf16 into the MXU (no-op converts if params already stored in bf16).
    x2 = x.reshape(M, D).astype(jnp.bfloat16)
    w2 = w.astype(jnp.bfloat16)
    b2 = b.astype(jnp.float32)
    if Mp != M:
        x2 = jnp.pad(x2, ((0, Mp - M), (0, 0)))
    if Vp != V:
        w2 = jnp.pad(w2, ((0, 0), (0, Vp - V)))
        b2 = jnp.pad(b2, ((0, Vp - V),), constant_values=_NEG_BIG)
    b2 = b2.reshape(1, Vp)

    grid = (Mp // tm, nv)

    # Advisory scheduling hint for XLA.
    cost = pl.CostEstimate(
        flops=2 * Mp * D * Vp,
        transcendentals=Mp * Vp,
        bytes_accessed=Mp * D * 2 + grid[0] * D * Vp * 2 + Vp * 4 + Mp * Vp * 4,
    )

    # VMEM budget: double-buffered bf16 x/w/bias tiles + resident f32 output
    # block + f32 staging + scratch, with headroom; never below 32 MiB.
    vmem_need = (2 * tm * D * 2          # x tile (bf16, double-buffered)
                 + 2 * D * tv * 2        # weight tile (bf16, double-buffered)
                 + 2 * tv * 4            # bias tile
                 + 2 * tm * Vp * 4       # resident output block
                 + tm * Vp * 4           # logit staging scratch
                 + 4 * tm * 4)           # running max / sum-exp
    vmem_limit = int(min(max(vmem_need + (4 << 20), 32 << 20), 100 << 20))

    out = pl.pallas_call(
        functools.partial(_generator_kernel, tv=tv, nv=nv),
        out_shape=jax.ShapeDtypeStruct((Mp, Vp), jnp.float32),
        grid_spec=pltpu.PrefetchScalarGridSpec(
            num_scalar_prefetch=0,
            grid=grid,
            in_specs=[
                pl.BlockSpec((tm, D), lambda i, j: (i, 0)),   # x row tile
                pl.BlockSpec((D, tv), lambda i, j: (0, j)),   # weight V tile
                pl.BlockSpec((1, tv), lambda i, j: (0, j)),   # bias V tile
            ],
            out_specs=pl.BlockSpec((tm, Vp), lambda i, j: (i, 0)),
            scratch_shapes=[
                pltpu.VMEM((nv, tm, tv), jnp.float32),  # staged raw logits
                pltpu.VMEM((tm, 1), jnp.float32),       # running max
                pltpu.VMEM((tm, 1), jnp.float32),       # running sum-exp
            ],
        ),
        compiler_params=pltpu.CompilerParams(
            dimension_semantics=("parallel", "arbitrary"),
            vmem_limit_bytes=vmem_limit,
        ),
        cost_estimate=cost,
    )(x2, w2, b2)

    out = out[:M, :V]
    return out.reshape(B, S, V)


def _reference(x, w, b):
    logits = jnp.einsum("bsd,dv->bsv", x.astype(jnp.float32),
                        w.astype(jnp.float32)) + b.astype(jnp.float32)
    return jax.nn.log_softmax(logits, axis=-1)


def _make_params(key, vocab):
    k_w, k_b = jax.random.split(key)
    bound = 1.0 / (D_MODEL ** 0.5)  # nn.Linear default init bounds
    w = jax.random.uniform(k_w, (D_MODEL, vocab), minval=-bound, maxval=bound,
                           dtype=jnp.float32)
    b = jax.random.uniform(k_b, (vocab,), minval=-bound, maxval=bound,
                           dtype=jnp.float32)
    return w, b


if __name__ == "__main__":
    key = jax.random.PRNGKey(0)
    k1, k2, k3, k4 = jax.random.split(key, 4)
    tol = dict(atol=5e-2, rtol=5e-2)  # bf16 matmul vs f32 reference

    # --- test 1: small aligned shapes --------------------------------------
    batch, seq, vocab = 2, 8, 256
    x = jax.random.normal(k1, (batch, seq, D_MODEL), dtype=jnp.float32)
    w, b = _make_params(k2, vocab)
    w_bf16 = w.astype(jnp.bfloat16)  # pre-store weight in compute dtype (once)
    out = jax.block_until_ready(generator_forward(x, w_bf16, b))
    ref = _reference(x, w, b)
    assert out.shape == (batch, seq, vocab)
    assert jnp.allclose(out, ref, **tol), float(jnp.max(jnp.abs(out - ref)))

    # --- test 2: ragged M and V (exercises row/column padding) -------------
    batch, seq, vocab = 3, 5, 200
    x = jax.random.normal(k3, (batch, seq, D_MODEL), dtype=jnp.float32)
    w, b = _make_params(k4, vocab)
    out = jax.block_until_ready(generator_forward(x, w, b))
    ref = _reference(x, w, b)
    assert out.shape == (batch, seq, vocab)
    assert jnp.allclose(out, ref, **tol), float(jnp.max(jnp.abs(out - ref)))

    # --- test 3: multi-tile grid (online logsumexp across V tiles) ---------
    batch, seq, vocab = 4, 8, 384
    x = jax.random.normal(k1, (batch, seq, D_MODEL), dtype=jnp.float32)
    w, b = _make_params(k2, vocab)
    out = jax.block_until_ready(generator_forward(x, w, b, tm=16, tv=128))
    ref = _reference(x, w, b)
    assert out.shape == (batch, seq, vocab)
    assert jnp.allclose(out, ref, **tol), float(jnp.max(jnp.abs(out - ref)))

    print("KERNEL_OK")
</pallas_src>

<mosaic_0001>
module attributes {stable_mosaic.version = 11 : i64} {
  func.func @_generator_kernel(%arg0: i32, %arg1: i32, %arg2: memref<16x512xbf16, #tpu.memory_space<vmem>>, %arg3: memref<512x256xbf16, #tpu.memory_space<vmem>>, %arg4: memref<1x256xf32, #tpu.memory_space<vmem>>, %arg5: memref<16x256xf32, #tpu.memory_space<vmem>>, %arg6: memref<1x16x256xf32, #tpu.memory_space<vmem>>, %arg7: memref<16x1xf32, #tpu.memory_space<vmem>>, %arg8: memref<16x1xf32, #tpu.memory_space<vmem>>) attributes {dimension_semantics = [#tpu.dimension_semantics<parallel>, #tpu.dimension_semantics<arbitrary>], iteration_bounds = array<i64: 1, 1>, scalar_prefetch = 0 : i64, scratch_operands = 3 : i64, tpu.core_type = #tpu.core_type<tc>, window_params = [{transform_indices = @transform_0, window_bounds = array<i64: 16, 512>}, {transform_indices = @transform_1, window_bounds = array<i64: 512, 256>}, {transform_indices = @transform_2, window_bounds = array<i64: 1, 256>}, {transform_indices = @transform_3, window_bounds = array<i64: 16, 256>}]} {
    %c0_i32 = arith.constant 0 : i32
    %0 = arith.cmpi eq, %arg1, %c0_i32 : i32
    %1 = arith.extui %0 : i1 to i32
    %c0_i32_0 = arith.constant 0 : i32
    %2 = arith.cmpi ne, %1, %c0_i32_0 : i32
    scf.if %2 {
      %cst_20 = arith.constant 0xFF800000 : f32
      %32 = vector.broadcast %cst_20 : f32 to vector<16x1xf32>
      %c0_21 = arith.constant 0 : index
      %c0_22 = arith.constant 0 : index
      %33 = vector.load %arg7[%c0_21, %c0_22] : memref<16x1xf32, #tpu.memory_space<vmem>>, vector<16x1xf32>
      tpu.vector_store %arg7[%c0_21, %c0_22], %32 {strides = array<i32>} : memref<16x1xf32, #tpu.memory_space<vmem>>, vector<16x1xf32>,
      %cst_23 = arith.constant 0.000000e+00 : f32
      %34 = vector.broadcast %cst_23 : f32 to vector<16x1xf32>
      %c0_24 = arith.constant 0 : index
      %c0_25 = arith.constant 0 : index
      %35 = vector.load %arg8[%c0_24, %c0_25] : memref<16x1xf32, #tpu.memory_space<vmem>>, vector<16x1xf32>
      tpu.vector_store %arg8[%c0_24, %c0_25], %34 {strides = array<i32>} : memref<16x1xf32, #tpu.memory_space<vmem>>, vector<16x1xf32>,
    } else {
    }
    %c0 = arith.constant 0 : index
    %c0_1 = arith.constant 0 : index
    %3 = vector.load %arg2[%c0, %c0_1] : memref<16x512xbf16, #tpu.memory_space<vmem>>, vector<16x512xbf16>
    %c0_2 = arith.constant 0 : index
    %c0_3 = arith.constant 0 : index
    %4 = vector.load %arg3[%c0_2, %c0_3] : memref<512x256xbf16, #tpu.memory_space<vmem>>, vector<512x256xbf16>
    %cst = arith.constant dense<0.000000e+00> : vector<16x256xf32>
    %5 = tpu.matmul %3, %4, %cst {dimension_numbers = #tpu.dot_dimension_numbers<[1], [0], [0], [1], [0, 0, 1, 1], [], []>} : vector<16x512xbf16>, vector<512x256xbf16>, vector<16x256xf32> -> vector<16x256xf32>
    %c0_4 = arith.constant 0 : index
    %c0_5 = arith.constant 0 : index
    %6 = vector.load %arg4[%c0_4, %c0_5] : memref<1x256xf32, #tpu.memory_space<vmem>>, vector<1x256xf32>
    %7 = vector.broadcast %6 : vector<1x256xf32> to vector<16x256xf32>
    %8 = arith.addf %5, %7 : vector<16x256xf32>
    %9 = arith.index_cast %arg1 : i32 to index
    %c0_6 = arith.constant 0 : index
    %c0_7 = arith.constant 0 : index
    %10 = vector.load %arg6[%9, %c0_6, %c0_7] : memref<1x16x256xf32, #tpu.memory_space<vmem>>, vector<1x16x256xf32>
    %11 = vector.shape_cast %10 : vector<1x16x256xf32> to vector<16x256xf32>
    %12 = vector.shape_cast %8 : vector<16x256xf32> to vector<1x16x256xf32>
    tpu.vector_store %arg6[%9, %c0_6, %c0_7], %12 {strides = array<i32>} : memref<1x16x256xf32, #tpu.memory_space<vmem>>, vector<1x16x256xf32>,
    %c0_8 = arith.constant 0 : index
    %c0_9 = arith.constant 0 : index
    %13 = vector.load %arg7[%c0_8, %c0_9] : memref<16x1xf32, #tpu.memory_space<vmem>>, vector<16x1xf32>
    %cst_10 = arith.constant dense<0xFF800000> : vector<16xf32>
    %14 = vector.multi_reduction <maximumf>, %8, %cst_10 [1] : vector<16x256xf32> to vector<16xf32>
    %15 = vector.shape_cast %14 : vector<16xf32> to vector<16x1xf32>
    %16 = arith.maximumf %13, %15 : vector<16x1xf32>
    %17 = arith.subf %13, %16 : vector<16x1xf32>
    %18 = math.exp %17 : vector<16x1xf32>
    %c0_11 = arith.constant 0 : index
    %c0_12 = arith.constant 0 : index
    %19 = vector.load %arg8[%c0_11, %c0_12] : memref<16x1xf32, #tpu.memory_space<vmem>>, vector<16x1xf32>
    %20 = arith.mulf %18, %19 : vector<16x1xf32>
    %21 = vector.broadcast %16 : vector<16x1xf32> to vector<16x256xf32>
    %22 = arith.subf %8, %21 : vector<16x256xf32>
    %23 = math.exp %22 : vector<16x256xf32>
    %cst_13 = arith.constant dense<0.000000e+00> : vector<16xf32>
    %24 = vector.multi_reduction <add>, %23, %cst_13 [1] : vector<16x256xf32> to vector<16xf32>
    %25 = vector.shape_cast %24 : vector<16xf32> to vector<16x1xf32>
    %26 = arith.addf %20, %25 : vector<16x1xf32>
    %c0_14 = arith.constant 0 : index
    %c0_15 = arith.constant 0 : index
    %27 = vector.load %arg8[%c0_14, %c0_15] : memref<16x1xf32, #tpu.memory_space<vmem>>, vector<16x1xf32>
    tpu.vector_store %arg8[%c0_14, %c0_15], %26 {strides = array<i32>} : memref<16x1xf32, #tpu.memory_space<vmem>>, vector<16x1xf32>,
    %c0_16 = arith.constant 0 : index
    %c0_17 = arith.constant 0 : index
    %28 = vector.load %arg7[%c0_16, %c0_17] : memref<16x1xf32, #tpu.memory_space<vmem>>, vector<16x1xf32>
    tpu.vector_store %arg7[%c0_16, %c0_17], %16 {strides = array<i32>} : memref<16x1xf32, #tpu.memory_space<vmem>>, vector<16x1xf32>,
    %c0_i32_18 = arith.constant 0 : i32
    %29 = arith.cmpi eq, %arg1, %c0_i32_18 : i32
    %30 = arith.extui %29 : i1 to i32
    %c0_i32_19 = arith.constant 0 : i32
    %31 = arith.cmpi ne, %30, %c0_i32_19 : i32
    scf.if %31 {
      %c0_20 = arith.constant 0 : index
      %c0_21 = arith.constant 0 : index
      %32 = vector.load %arg7[%c0_20, %c0_21] : memref<16x1xf32, #tpu.memory_space<vmem>>, vector<16x1xf32>
      %c0_22 = arith.constant 0 : index
      %c0_23 = arith.constant 0 : index
      %33 = vector.load %arg8[%c0_22, %c0_23] : memref<16x1xf32, #tpu.memory_space<vmem>>, vector<16x1xf32>
      %34 = math.log %33 : vector<16x1xf32>
      %35 = arith.addf %32, %34 : vector<16x1xf32>
      %c0_24 = arith.constant 0 : index
      %c0_25 = arith.constant 0 : index
      %c0_26 = arith.constant 0 : index
      %36 = vector.load %arg6[%c0_24, %c0_25, %c0_26] : memref<1x16x256xf32, #tpu.memory_space<vmem>>, vector<1x16x256xf32>
      %37 = vector.shape_cast %36 : vector<1x16x256xf32> to vector<16x256xf32>
      %38 = vector.broadcast %35 : vector<16x1xf32> to vector<16x256xf32>
      %39 = arith.subf %37, %38 : vector<16x256xf32>
      %c0_27 = arith.constant 0 : index
      %c0_28 = arith.constant 0 : index
      %40 = vector.load %arg5[%c0_27, %c0_28] : memref<16x256xf32, #tpu.memory_space<vmem>>, vector<16x256xf32>
      tpu.vector_store %arg5[%c0_27, %c0_28], %39 {strides = array<i32>} : memref<16x256xf32, #tpu.memory_space<vmem>>, vector<16x256xf32>,
    } else {
    }
    return
  }
  func.func @transform_0(%arg0: i32, %arg1: i32) -> (i32, i32) {
    %c0_i32 = arith.constant 0 : i32
    %c0_i32_0 = arith.constant 0 : i32
    return %arg0, %c0_i32 : i32, i32
  }
  func.func @transform_1(%arg0: i32, %arg1: i32) -> (i32, i32) {
    %c0_i32 = arith.constant 0 : i32
    %c0_i32_0 = arith.constant 0 : i32
    return %c0_i32, %arg1 : i32, i32
  }
  func.func @transform_2(%arg0: i32, %arg1: i32) -> (i32, i32) {
    %c0_i32 = arith.constant 0 : i32
    %c0_i32_0 = arith.constant 0 : i32
    return %c0_i32, %arg1 : i32, i32
  }
  func.func @transform_3(%arg0: i32, %arg1: i32) -> (i32, i32) {
    %c0_i32 = arith.constant 0 : i32
    %c0_i32_0 = arith.constant 0 : i32
    return %arg0, %c0_i32 : i32, i32
  }
}

</mosaic_0001>

<llo_original>
// kernel: generator_forward.1
$region0: #{generator_forward.1}
  #allocation0 [shape = 'u32[]', space=smem, size = 0x4, offset = 0x4, fixed_abs, tag = 'smem constant byte address 0x4 - core index']
  #allocation1 [shape = 'u32[144,128]{1,0:T(1,128)}', space=vmem, size = 0x12000, scoped, tag = 'internal scratch']
  #allocation2 [shape = 'f32[1,16,256]{2,1,0:T(8,128)}', space=vmem, size = 0x4000, scoped, tag = 'scratch operand']
  #allocation3 [shape = 'f32[16,1]{1,0:T(8,128)}', space=vmem, size = 0x2000, scoped, tag = 'scratch operand']
  #allocation4 [shape = 'f32[16,1]{1,0:T(8,128)}', space=vmem, size = 0x2000, scoped, tag = 'scratch operand']
  %s0 = inlined_call_operand.vmem [shape: bf16[16,512], index: 0, kind: input, shape index: {}]
  %s1 = inlined_call_operand.hbm [shape: bf16[512,256], index: 1, kind: input, shape index: {}]
  %s2 = inlined_call_operand.vmem [shape: f32[1,256], index: 2, kind: input, shape index: {}]
  %s3 = inlined_call_operand.hbm [shape: f32[16,256], index: 3, kind: output, shape index: {}]
  %s4 = sld [smem:[#allocation0]]
  $region34: #{generator_forward.1} parent=0
    _
  %s6 = ssub.s32 1, %s4
  %s7 = scalar_select 0, %s6, %s4
  $region1: #{generator_forward.1} parent=0
    #allocation5 [shape = 'u8[262144]{0}', space=vmem, size = 0x40000, scoped, tag = 'input window, operand 1, single buffered']
    #allocation6 [shape = 's32[1]{0}', space=sflag, size = 0x4, scoped, tag = 'scoped memory for generator_forward.1']
    #allocation7 [shape = 's32[1]{0}', space=sflag, size = 0x4, scoped, tag = 'scoped memory for generator_forward.1']
    #allocation8 [shape = 'u8[16384]{0}', space=vmem, size = 0x4000, scoped, tag = 'output window, operand 0, single buffered']
    %8 = vsyncpa [#allocation6], 0
    %9 = vsyncpa [#allocation7], 0
    // Predicated region
    $region2: #{generator_forward.1} parent=1 // pred_check
      _
    $region3: #{generator_forward.1} parent=1 // pred_check_branch
      %11 = sbr.rel (0) target = $region5
    $region4: #{generator_forward.1} parent=1 // pred_region
      _
    $region5: #{generator_forward.1} parent=1 // pred_fallthru
      _
    // Predicated region
    $region6: #{generator_forward.1} parent=1 // pred_check
      _
    $region7: #{generator_forward.1} parent=1 // pred_check_branch
      %13 = sbr.rel (0) target = $region9
    $region8: #{generator_forward.1} parent=1 // pred_region
      %s15 = ssub.s32 8192, 8192
      %16 = vsyncadd [#allocation6], %s15
      %s17 = sshll.u32 [#allocation5], 4
      %s18 = int_to_ptr.vmem [resolvable:$true] %s17
      %23 = dma.hbm_to_vmem [thread:$0]  %s1, 8192, %s18, [#allocation6], 128, 128, 8
    $region9: #{generator_forward.1} parent=1 // pred_fallthru
      _
    // Predicated region
    $region10: #{generator_forward.1} parent=1 // pred_check
      _
    $region11: #{generator_forward.1} parent=1 // pred_check_branch
      %25 = sbr.rel (0) target = $region13
    $region12: #{generator_forward.1} parent=1 // pred_region
      _
    $region13: #{generator_forward.1} parent=1 // pred_fallthru
      _
    // Predicated region
    $region14: #{generator_forward.1} parent=1 // pred_check
      _
    $region15: #{generator_forward.1} parent=1 // pred_check_branch
      %27 = sbr.rel (0) target = $region17
    $region16: #{generator_forward.1} parent=1 // pred_region
      %28 = dma.done [#allocation6], 8192
    $region17: #{generator_forward.1} parent=1 // pred_fallthru
      _
    %p29 = scmp.eq.s32.totalorder 0, 0
    // Predicated region
    $region18: #{generator_forward.1} parent=1 // pred_check
      %p30 = pneg %p29
    $region19: #{generator_forward.1} parent=1 // pred_check_branch
      %32 = sbr.rel (%p30) target = $region21
    $region20: #{generator_forward.1} parent=1 // pred_region
      %vm33 = vcmask 7168
      %34 = vst.msk [vmem:[#allocation3] sm:$0xff] %vm33, -inf
      %35 = vst.msk [vmem:[#allocation3 + $0x8] sm:$0xff] %vm33, -inf
      %36 = vst.msk [vmem:[#allocation4] sm:$0xff] %vm33, 0.0
      %37 = vst.msk [vmem:[#allocation4 + $0x8] sm:$0xff] %vm33, 0.0
    $region21: #{generator_forward.1} parent=1 // pred_fallthru
      _
    %v38 = vld [vmem:[%s0] sm:$0xff]
    %v39 = vld [vmem:[%s0 + $0x8] sm:$0xff]
    %v40 = vld [vmem:[%s0 + $0x10] sm:$0xff]
    %v41 = vld [vmem:[%s0 + $0x18] sm:$0xff]
    %v42 = vld [vmem:[#allocation5] sm:$0xff]
    %v43 = vld [vmem:[#allocation5 + $0x8] sm:$0xff]
    %v44 = vld [vmem:[#allocation5 + $0x10] sm:$0xff]
    %v45 = vld [vmem:[#allocation5 + $0x18] sm:$0xff]
    %v46 = vld [vmem:[#allocation5 + $0x20] sm:$0xff]
    %v47 = vld [vmem:[#allocation5 + $0x28] sm:$0xff]
    %v48 = vld [vmem:[#allocation5 + $0x30] sm:$0xff]
    %v49 = vld [vmem:[#allocation5 + $0x38] sm:$0xff]
    %v50 = vld [vmem:[#allocation5 + $0x40] sm:$0xff]
    %v51 = vld [vmem:[#allocation5 + $0x48] sm:$0xff]
    %v52 = vld [vmem:[#allocation5 + $0x50] sm:$0xff]
    %v53 = vld [vmem:[#allocation5 + $0x58] sm:$0xff]
    %v54 = vld [vmem:[#allocation5 + $0x60] sm:$0xff]
    %v55 = vld [vmem:[#allocation5 + $0x68] sm:$0xff]
    %v56 = vld [vmem:[#allocation5 + $0x70] sm:$0xff]
    %v57 = vld [vmem:[#allocation5 + $0x78] sm:$0xff]
    %v58 = vld [vmem:[#allocation5 + $0x80] sm:$0xff]
    %v59 = vld [vmem:[#allocation5 + $0x88] sm:$0xff]
    %v60 = vld [vmem:[#allocation5 + $0x90] sm:$0xff]
    %v61 = vld [vmem:[#allocation5 + $0x98] sm:$0xff]
    %v62 = vld [vmem:[#allocation5 + $0xa0] sm:$0xff]
    %v63 = vld [vmem:[#allocation5 + $0xa8] sm:$0xff]
    %v64 = vld [vmem:[#allocation5 + $0xb0] sm:$0xff]
    %v65 = vld [vmem:[#allocation5 + $0xb8] sm:$0xff]
    %v66 = vld [vmem:[#allocation5 + $0xc0] sm:$0xff]
    %v67 = vld [vmem:[#allocation5 + $0xc8] sm:$0xff]
    %v68 = vld [vmem:[#allocation5 + $0xd0] sm:$0xff]
    %v69 = vld [vmem:[#allocation5 + $0xd8] sm:$0xff]
    %v70 = vld [vmem:[#allocation5 + $0xe0] sm:$0xff]
    %v71 = vld [vmem:[#allocation5 + $0xe8] sm:$0xff]
    %v72 = vld [vmem:[#allocation5 + $0xf0] sm:$0xff]
    %v73 = vld [vmem:[#allocation5 + $0xf8] sm:$0xff]
    %v74 = vld [vmem:[#allocation5 + $0x100] sm:$0xff]
    %v75 = vld [vmem:[#allocation5 + $0x108] sm:$0xff]
    %v76 = vld [vmem:[#allocation5 + $0x110] sm:$0xff]
    %v77 = vld [vmem:[#allocation5 + $0x118] sm:$0xff]
    %v78 = vld [vmem:[#allocation5 + $0x120] sm:$0xff]
    %v79 = vld [vmem:[#allocation5 + $0x128] sm:$0xff]
    %v80 = vld [vmem:[#allocation5 + $0x130] sm:$0xff]
    %v81 = vld [vmem:[#allocation5 + $0x138] sm:$0xff]
    %v82 = vld [vmem:[#allocation5 + $0x140] sm:$0xff]
    %v83 = vld [vmem:[#allocation5 + $0x148] sm:$0xff]
    %v84 = vld [vmem:[#allocation5 + $0x150] sm:$0xff]
    %v85 = vld [vmem:[#allocation5 + $0x158] sm:$0xff]
    %v86 = vld [vmem:[#allocation5 + $0x160] sm:$0xff]
    %v87 = vld [vmem:[#allocation5 + $0x168] sm:$0xff]
    %v88 = vld [vmem:[#allocation5 + $0x170] sm:$0xff]
    %v89 = vld [vmem:[#allocation5 + $0x178] sm:$0xff]
    %v90 = vld [vmem:[#allocation5 + $0x180] sm:$0xff]
    %v91 = vld [vmem:[#allocation5 + $0x188] sm:$0xff]
    %v92 = vld [vmem:[#allocation5 + $0x190] sm:$0xff]
    %v93 = vld [vmem:[#allocation5 + $0x198] sm:$0xff]
    %v94 = vld [vmem:[#allocation5 + $0x1a0] sm:$0xff]
    %v95 = vld [vmem:[#allocation5 + $0x1a8] sm:$0xff]
    %v96 = vld [vmem:[#allocation5 + $0x1b0] sm:$0xff]
    %v97 = vld [vmem:[#allocation5 + $0x1b8] sm:$0xff]
    %v98 = vld [vmem:[#allocation5 + $0x1c0] sm:$0xff]
    %v99 = vld [vmem:[#allocation5 + $0x1c8] sm:$0xff]
    %v100 = vld [vmem:[#allocation5 + $0x1d0] sm:$0xff]
    %v101 = vld [vmem:[#allocation5 + $0x1d8] sm:$0xff]
    %v102 = vld [vmem:[#allocation5 + $0x1e0] sm:$0xff]
    %v103 = vld [vmem:[#allocation5 + $0x1e8] sm:$0xff]
    %v104 = vld [vmem:[#allocation5 + $0x1f0] sm:$0xff]
    %v105 = vld [vmem:[#allocation5 + $0x1f8] sm:$0xff]
    %v106 = vld [vmem:[%s2] sm:$0x3]
    %v108 = vlaneseq
    %v109 = vshrl.u32 %v108, 7
    %v110 = vsub.s32 0, %v109
    %v111 = vrot.slane %v106, %v110
    %v112 = vlaneseq
    %v113 = vshrl.u32 %v112, 7
    %v114 = vsub.s32 1, %v113
    %v115 = vrot.slane %v106, %v114
    %v122 = vunpack.c.l.b16 %v38
    %v123 = vunpack.c.h.b16 %v38
    %v124 = vunpack.c.l.b16 %v39
    %v125 = vunpack.c.h.b16 %v39
    %v126 = vunpack.c.l.b16 %v40
    %v127 = vunpack.c.h.b16 %v40
    %v128 = vunpack.c.l.b16 %v41
    %v129 = vunpack.c.h.b16 %v41
    %v130 = vpack.c.b16 %v126, %v122
    %v131 = vpack.c.b16 %v127, %v123
    %v132 = vpack.c.b16 %v128, %v124
    %v133 = vpack.c.b16 %v129, %v125
    %v202 = vunpack.c.l.b16 %v42
    %v203 = vunpack.c.h.b16 %v42
    %v204 = vunpack.c.l.b16 %v43
    %v205 = vunpack.c.h.b16 %v43
    %v206 = vunpack.c.l.b16 %v44
    %v207 = vunpack.c.h.b16 %v44
    %v208 = vunpack.c.l.b16 %v45
    %v209 = vunpack.c.h.b16 %v45
    %v210 = vunpack.c.l.b16 %v46
    %v211 = vunpack.c.h.b16 %v46
    %v212 = vunpack.c.l.b16 %v47
    %v213 = vunpack.c.h.b16 %v47
    %v214 = vunpack.c.l.b16 %v48
    %v215 = vunpack.c.h.b16 %v48
    %v216 = vunpack.c.l.b16 %v49
    %v217 = vunpack.c.h.b16 %v49
    %v218 = vunpack.c.l.b16 %v50
    %v219 = vunpack.c.h.b16 %v50
    %v220 = vunpack.c.l.b16 %v51
    %v221 = vunpack.c.h.b16 %v51
    %v222 = vunpack.c.l.b16 %v52
    %v223 = vunpack.c.h.b16 %v52
    %v224 = vunpack.c.l.b16 %v53
    %v225 = vunpack.c.h.b16 %v53
    %v226 = vunpack.c.l.b16 %v54
    %v227 = vunpack.c.h.b16 %v54
    %v228 = vunpack.c.l.b16 %v55
    %v229 = vunpack.c.h.b16 %v55
    %v230 = vunpack.c.l.b16 %v56
    %v231 = vunpack.c.h.b16 %v56
    %v232 = vunpack.c.l.b16 %v57
    %v233 = vunpack.c.h.b16 %v57
    %v234 = vunpack.c.l.b16 %v58
    %v235 = vunpack.c.h.b16 %v58
    %v236 = vunpack.c.l.b16 %v59
    %v237 = vunpack.c.h.b16 %v59
    %v238 = vunpack.c.l.b16 %v60
    %v239 = vunpack.c.h.b16 %v60
    %v240 = vunpack.c.l.b16 %v61
    %v241 = vunpack.c.h.b16 %v61
    %v242 = vunpack.c.l.b16 %v62
    %v243 = vunpack.c.h.b16 %v62
    %v244 = vunpack.c.l.b16 %v63
    %v245 = vunpack.c.h.b16 %v63
    %v246 = vunpack.c.l.b16 %v64
    %v247 = vunpack.c.h.b16 %v64
    %v248 = vunpack.c.l.b16 %v65
    %v249 = vunpack.c.h.b16 %v65
    %v250 = vunpack.c.l.b16 %v66
    %v251 = vunpack.c.h.b16 %v66
    %v252 = vunpack.c.l.b16 %v67
    %v253 = vunpack.c.h.b16 %v67
    %v254 = vunpack.c.l.b16 %v68
    %v255 = vunpack.c.h.b16 %v68
    %v256 = vunpack.c.l.b16 %v69
    %v257 = vunpack.c.h.b16 %v69
    %v258 = vunpack.c.l.b16 %v70
    %v259 = vunpack.c.h.b16 %v70
    %v260 = vunpack.c.l.b16 %v71
    %v261 = vunpack.c.h.b16 %v71
    %v262 = vunpack.c.l.b16 %v72
    %v263 = vunpack.c.h.b16 %v72
    %v264 = vunpack.c.l.b16 %v73
    %v265 = vunpack.c.h.b16 %v73
    %v266 = vunpack.c.l.b16 %v74
    %v267 = vunpack.c.h.b16 %v74
    %v268 = vunpack.c.l.b16 %v75
    %v269 = vunpack.c.h.b16 %v75
    %v270 = vunpack.c.l.b16 %v76
    %v271 = vunpack.c.h.b16 %v76
    %v272 = vunpack.c.l.b16 %v77
    %v273 = vunpack.c.h.b16 %v77
    %v274 = vunpack.c.l.b16 %v78
    %v275 = vunpack.c.h.b16 %v78
    %v276 = vunpack.c.l.b16 %v79
    %v277 = vunpack.c.h.b16 %v79
    %v278 = vunpack.c.l.b16 %v80
    %v279 = vunpack.c.h.b16 %v80
    %v280 = vunpack.c.l.b16 %v81
    %v281 = vunpack.c.h.b16 %v81
    %v282 = vunpack.c.l.b16 %v82
    %v283 = vunpack.c.h.b16 %v82
    %v284 = vunpack.c.l.b16 %v83
    %v285 = vunpack.c.h.b16 %v83
    %v286 = vunpack.c.l.b16 %v84
    %v287 = vunpack.c.h.b16 %v84
    %v288 = vunpack.c.l.b16 %v85
    %v289 = vunpack.c.h.b16 %v85
    %v290 = vunpack.c.l.b16 %v86
    %v291 = vunpack.c.h.b16 %v86
    %v292 = vunpack.c.l.b16 %v87
    %v293 = vunpack.c.h.b16 %v87
    %v294 = vunpack.c.l.b16 %v88
    %v295 = vunpack.c.h.b16 %v88
    %v296 = vunpack.c.l.b16 %v89
    %v297 = vunpack.c.h.b16 %v89
    %v298 = vunpack.c.l.b16 %v90
    %v299 = vunpack.c.h.b16 %v90
    %v300 = vunpack.c.l.b16 %v91
    %v301 = vunpack.c.h.b16 %v91
    %v302 = vunpack.c.l.b16 %v92
    %v303 = vunpack.c.h.b16 %v92
    %v304 = vunpack.c.l.b16 %v93
    %v305 = vunpack.c.h.b16 %v93
    %v306 = vunpack.c.l.b16 %v94
    %v307 = vunpack.c.h.b16 %v94
    %v308 = vunpack.c.l.b16 %v95
    %v309 = vunpack.c.h.b16 %v95
    %v310 = vunpack.c.l.b16 %v96
    %v311 = vunpack.c.h.b16 %v96
    %v312 = vunpack.c.l.b16 %v97
    %v313 = vunpack.c.h.b16 %v97
    %v314 = vunpack.c.l.b16 %v98
    %v315 = vunpack.c.h.b16 %v98
    %v316 = vunpack.c.l.b16 %v99
    %v317 = vunpack.c.h.b16 %v99
    %v318 = vunpack.c.l.b16 %v100
    %v319 = vunpack.c.h.b16 %v100
    %v320 = vunpack.c.l.b16 %v101
    %v321 = vunpack.c.h.b16 %v101
    %v322 = vunpack.c.l.b16 %v102
    %v323 = vunpack.c.h.b16 %v102
    %v324 = vunpack.c.l.b16 %v103
    %v325 = vunpack.c.h.b16 %v103
    %v326 = vunpack.c.l.b16 %v104
    %v327 = vunpack.c.h.b16 %v104
    %v328 = vunpack.c.l.b16 %v105
    %v329 = vunpack.c.h.b16 %v105
    %v330 = vpack.c.b16 %v204, %v202
    %v331 = vpack.c.b16 %v205, %v203
    %v332 = vpack.c.b16 %v208, %v206
    %v333 = vpack.c.b16 %v209, %v207
    %v334 = vpack.c.b16 %v212, %v210
    %v335 = vpack.c.b16 %v213, %v211
    %v336 = vpack.c.b16 %v216, %v214
    %v337 = vpack.c.b16 %v217, %v215
    %v338 = vpack.c.b16 %v220, %v218
    %v339 = vpack.c.b16 %v221, %v219
    %v340 = vpack.c.b16 %v224, %v222
    %v341 = vpack.c.b16 %v225, %v223
    %v342 = vpack.c.b16 %v228, %v226
    %v343 = vpack.c.b16 %v229, %v227
    %v344 = vpack.c.b16 %v232, %v230
    %v345 = vpack.c.b16 %v233, %v231
    %v346 = vpack.c.b16 %v236, %v234
    %v347 = vpack.c.b16 %v237, %v235
    %v348 = vpack.c.b16 %v240, %v238
    %v349 = vpack.c.b16 %v241, %v239
    %v350 = vpack.c.b16 %v244, %v242
    %v351 = vpack.c.b16 %v245, %v243
    %v352 = vpack.c.b16 %v248, %v246
    %v353 = vpack.c.b16 %v249, %v247
    %v354 = vpack.c.b16 %v252, %v250
    %v355 = vpack.c.b16 %v253, %v251
    %v356 = vpack.c.b16 %v256, %v254
    %v357 = vpack.c.b16 %v257, %v255
    %v358 = vpack.c.b16 %v260, %v258
    %v359 = vpack.c.b16 %v261, %v259
    %v360 = vpack.c.b16 %v264, %v262
    %v361 = vpack.c.b16 %v265, %v263
    %v362 = vpack.c.b16 %v268, %v266
    %v363 = vpack.c.b16 %v269, %v267
    %v364 = vpack.c.b16 %v272, %v270
    %v365 = vpack.c.b16 %v273, %v271
    %v366 = vpack.c.b16 %v276, %v274
    %v367 = vpack.c.b16 %v277, %v275
    %v368 = vpack.c.b16 %v280, %v278
    %v369 = vpack.c.b16 %v281, %v279
    %v370 = vpack.c.b16 %v284, %v282
    %v371 = vpack.c.b16 %v285, %v283
    %v372 = vpack.c.b16 %v288, %v286
    %v373 = vpack.c.b16 %v289, %v287
    %v374 = vpack.c.b16 %v292, %v290
    %v375 = vpack.c.b16 %v293, %v291
    %v376 = vpack.c.b16 %v296, %v294
    %v377 = vpack.c.b16 %v297, %v295
    %v378 = vpack.c.b16 %v300, %v298
    %v379 = vpack.c.b16 %v301, %v299
    %v380 = vpack.c.b16 %v304, %v302
    %v381 = vpack.c.b16 %v305, %v303
    %v382 = vpack.c.b16 %v308, %v306
    %v383 = vpack.c.b16 %v309, %v307
    %v384 = vpack.c.b16 %v312, %v310
    %v385 = vpack.c.b16 %v313, %v311
    %v386 = vpack.c.b16 %v316, %v314
    %v387 = vpack.c.b16 %v317, %v315
    %v388 = vpack.c.b16 %v320, %v318
    %v389 = vpack.c.b16 %v321, %v319
    %v390 = vpack.c.b16 %v324, %v322
    %v391 = vpack.c.b16 %v325, %v323
    %v392 = vpack.c.b16 %v328, %v326
    %v393 = vpack.c.b16 %v329, %v327
    %458 = vmatprep.subr.bf16.mxu0 %v345
    %459 = vmatpush1.bf16.msra.mxu0 %v344
    %460 = vmatprep.subr.bf16.mxu0 %v343
    %461 = vmatpush1.bf16.msra.mxu0 %v342
    %462 = vmatprep.subr.bf16.mxu0 %v341
    %463 = vmatpush1.bf16.msra.mxu0 %v340
    %464 = vmatprep.subr.bf16.mxu0 %v339
    %465 = vmatpush1.bf16.msra.mxu0 %v338
    %466 = vmatprep.subr.bf16.mxu0 %v337
    %467 = vmatpush1.bf16.msra.mxu0 %v336
    %468 = vmatprep.subr.bf16.mxu0 %v335
    %469 = vmatpush1.bf16.msra.mxu0 %v334
    %470 = vmatprep.subr.bf16.mxu0 %v333
    %471 = vmatpush1.bf16.msra.mxu0 %v332
    %472 = vmatprep.subr.bf16.mxu0 %v331
    %473 = vmatpush1.bf16.msra.mxu0 %v330
    %474 = vmatprep.subr.bf16.mxu0 %v361
    %475 = vmatpush2.bf16.msra.mxu0 %v360
    %476 = vmatprep.subr.bf16.mxu0 %v359
    %477 = vmatpush2.bf16.msra.mxu0 %v358
    %478 = vmatprep.subr.bf16.mxu0 %v357
    %479 = vmatpush2.bf16.msra.mxu0 %v356
    %480 = vmatprep.subr.bf16.mxu0 %v355
    %481 = vmatpush2.bf16.msra.mxu0 %v354
    %482 = vmatprep.subr.bf16.mxu0 %v353
    %483 = vmatpush2.bf16.msra.mxu0 %v352
    %484 = vmatprep.subr.bf16.mxu0 %v351
    %485 = vmatpush2.bf16.msra.mxu0 %v350
    %486 = vmatprep.subr.bf16.mxu0 %v349
    %487 = vmatpush2.bf16.msra.mxu0 %v348
    %488 = vmatprep.subr.bf16.mxu0 %v347
    %489 = vmatpush2.bf16.msra.mxu0 %v346
    %490 = vmatprep.mubr.bf16.mxu0 %v131
    %491 = vmatmul.mubr.bf16.gmra.mxu0 %v130
    %v492 = vpop.f32.mrf.mxu0
    %v493 = vadd.f32 %v111, %v492
    %v494 = vpop.f32.mrf.mxu0
    %v495 = vadd.f32 %v115, %v494
    %v496 = vpop.f32.mrf.mxu0
    %v497 = vadd.f32 %v111, %v496
    %v498 = vpop.f32.mrf.mxu0
    %v499 = vadd.f32 %v115, %v498
    %500 = vdwg.mxu0
    %501 = vmatprep.subr.bf16.mxu0 %v377
    %502 = vmatpush1.bf16.msra.mxu0 %v376
    %503 = vmatprep.subr.bf16.mxu0 %v375
    %504 = vmatpush1.bf16.msra.mxu0 %v374
    %505 = vmatprep.subr.bf16.mxu0 %v373
    %506 = vmatpush1.bf16.msra.mxu0 %v372
    %507 = vmatprep.subr.bf16.mxu0 %v371
    %508 = vmatpush1.bf16.msra.mxu0 %v370
    %509 = vmatprep.subr.bf16.mxu0 %v369
    %510 = vmatpush1.bf16.msra.mxu0 %v368
    %511 = vmatprep.subr.bf16.mxu0 %v367
    %512 = vmatpush1.bf16.msra.mxu0 %v366
    %513 = vmatprep.subr.bf16.mxu0 %v365
    %514 = vmatpush1.bf16.msra.mxu0 %v364
    %515 = vmatprep.subr.bf16.mxu0 %v363
    %516 = vmatpush1.bf16.msra.mxu0 %v362
    %517 = vmatprep.subr.bf16.mxu0 %v393
    %518 = vmatpush2.bf16.msra.mxu0 %v392
    %519 = vmatprep.subr.bf16.mxu0 %v391
    %520 = vmatpush2.bf16.msra.mxu0 %v390
    %521 = vmatprep.subr.bf16.mxu0 %v389
    %522 = vmatpush2.bf16.msra.mxu0 %v388
    %523 = vmatprep.subr.bf16.mxu0 %v387
    %524 = vmatpush2.bf16.msra.mxu0 %v386
    %525 = vmatprep.subr.bf16.mxu0 %v385
    %526 = vmatpush2.bf16.msra.mxu0 %v384
    %527 = vmatprep.subr.bf16.mxu0 %v383
    %528 = vmatpush2.bf16.msra.mxu0 %v382
    %529 = vmatprep.subr.bf16.mxu0 %v381
    %530 = vmatpush2.bf16.msra.mxu0 %v380
    %531 = vmatprep.subr.bf16.mxu0 %v379
    %532 = vmatpush2.bf16.msra.mxu0 %v378
    %533 = vmatprep.mubr.bf16.mxu0 %v133
    %534 = vmatmul.mubr.bf16.gmra.mxu0 %v132
    %v535 = vpop.f32.mrf.mxu0
    %v536 = vadd.f32 %v493, %v535
    %v537 = vpop.f32.mrf.mxu0
    %v538 = vadd.f32 %v495, %v537
    %v539 = vpop.f32.mrf.mxu0
    %v540 = vadd.f32 %v497, %v539
    %v541 = vpop.f32.mrf.mxu0
    %v542 = vadd.f32 %v499, %v541
    %543 = vdwg.mxu0
    %s544 = smul.u32 0, 4
    %s545 = smul.addr %s544, 8
    %s546 = scalar_lea.vmem [#allocation2], %s545
    %547 = vst [vmem:[%s546] sm:$0xff] %v536
    %548 = vst [vmem:[%s546 + $0x8] sm:$0xff] %v538
    %549 = vst [vmem:[%s546 + $0x10] sm:$0xff] %v540
    %550 = vst [vmem:[%s546 + $0x18] sm:$0xff] %v542
    %v551 = vld [vmem:[#allocation3] sm:$0xff]
    %v552 = vld [vmem:[#allocation3 + $0x8] sm:$0xff]
    %v553 = vmax.f32 %v536, %v538
    %554 = vmax.xlane.f32.xlu0 %v553
    %v555 = vpop.xlane.xlu0 %554
    %v556 = vmax.f32 %v540, %v542
    %557 = vmax.xlane.f32.xlu0 %v556
    %v558 = vpop.xlane.xlu0 %557
    %v559 = vmax.f32 %v551, %v555
    %v560 = vmax.f32 %v552, %v558
    %v561 = vsub.f32 %v551, %v559
    %v562 = vsub.f32 %v552, %v560
    %v563 = vmul.f32 %v561, 1.442695
    %v564 = vpow.pop %v563
    %v565 = vmul.f32 %v562, 1.442695
    %v566 = vpow.pop %v565
    %v567 = vld [vmem:[#allocation4] sm:$0xff]
    %v568 = vld [vmem:[#allocation4 + $0x8] sm:$0xff]
    %v569 = vmul.f32 %v564, %v567
    %v570 = vmul.f32 %v566, %v568
    %572 = vset.pattern.permute.xlu0 0
    %573 = vperm.xlu0 %572, %v559
    %v574 = vpop.permute.xlu0 %573
    %577 = vset.pattern.permute.xlu0 0
    %578 = vperm.xlu0 %577, %v560
    %v579 = vpop.permute.xlu0 %578
    %v581 = vsub.f32 %v536, %v574
    %v582 = vsub.f32 %v538, %v574
    %v583 = vsub.f32 %v540, %v579
    %v584 = vsub.f32 %v542, %v579
    %v585 = vmul.f32 %v581, 1.442695
    %v586 = vpow.pop %v585
    %v587 = vmul.f32 %v582, 1.442695
    %v588 = vpow.pop %v587
    %v589 = vmul.f32 %v583, 1.442695
    %v590 = vpow.pop %v589
    %v591 = vmul.f32 %v584, 1.442695
    %v592 = vpow.pop %v591
    %v593 = vadd.f32 %v586, %v588
    %594 = vadd.xlane.f32.xlu0 %v593
    %v595 = vpop.xlane.xlu0 %594
    %v596 = vadd.f32 %v590, %v592
    %597 = vadd.xlane.f32.xlu0 %v596
    %v598 = vpop.xlane.xlu0 %597
    %v599 = vadd.f32 %v569, %v595
    %v600 = vadd.f32 %v570, %v598
    %vm601 = vcmask 7168
    %602 = vst.msk [vmem:[#allocation4] sm:$0xff] %vm601, %v599
    %603 = vst.msk [vmem:[#allocation4 + $0x8] sm:$0xff] %vm601, %v600
    %604 = vst.msk [vmem:[#allocation3] sm:$0xff] %vm601, %v559
    %605 = vst.msk [vmem:[#allocation3 + $0x8] sm:$0xff] %vm601, %v560
    // Predicated region
    $region22: #{generator_forward.1} parent=1 // pred_check
      %p606 = pneg %p29
    $region23: #{generator_forward.1} parent=1 // pred_check_branch
      %608 = sbr.rel (%p606) target = $region25
    $region24: #{generator_forward.1} parent=1 // pred_region
      %v609 = vld [vmem:[#allocation3] sm:$0xff]
      %v610 = vld [vmem:[#allocation3 + $0x8] sm:$0xff]
      %v611 = vld [vmem:[#allocation4] sm:$0xff]
      %v612 = vld [vmem:[#allocation4 + $0x8] sm:$0xff]
      %v613 = vlog2.pop %v611
      %v614 = vmul.f32 %v613, 0.6931472
      %v615 = vlog2.pop %v612
      %v616 = vmul.f32 %v615, 0.6931472
      %v617 = vadd.f32 %v609, %v614
      %v618 = vadd.f32 %v610, %v616
      %v619 = vld [vmem:[#allocation2] sm:$0xff]
      %v620 = vld [vmem:[#allocation2 + $0x8] sm:$0xff]
      %v621 = vld [vmem:[#allocation2 + $0x10] sm:$0xff]
      %v622 = vld [vmem:[#allocation2 + $0x18] sm:$0xff]
      %624 = vset.pattern.permute.xlu0 0
      %625 = vperm.xlu0 %624, %v617
      %v626 = vpop.permute.xlu0 %625
      %629 = vset.pattern.permute.xlu0 0
      %630 = vperm.xlu0 %629, %v618
      %v631 = vpop.permute.xlu0 %630
      %v633 = vsub.f32 %v619, %v626
      %v634 = vsub.f32 %v620, %v626
      %v635 = vsub.f32 %v621, %v631
      %v636 = vsub.f32 %v622, %v631
      %637 = vst [vmem:[#allocation8] sm:$0xff] %v633
      %638 = vst [vmem:[#allocation8 + $0x8] sm:$0xff] %v634
      %639 = vst [vmem:[#allocation8 + $0x10] sm:$0xff] %v635
      %640 = vst [vmem:[#allocation8 + $0x18] sm:$0xff] %v636
    $region25: #{generator_forward.1} parent=1 // pred_fallthru
      _
    // Predicated region
    $region26: #{generator_forward.1} parent=1 // pred_check
      _
    $region27: #{generator_forward.1} parent=1 // pred_check_branch
      %642 = sbr.rel (0) target = $region29
    $region28: #{generator_forward.1} parent=1 // pred_region
      %s644 = ssub.s32 512, 512
      %645 = vsyncadd [#allocation7], %s644
      %s646 = sshll.u32 [#allocation8], 4
      %s647 = int_to_ptr.vmem [resolvable:$true] %s646
      %652 = dma.vmem_to_hbm [thread:$0]  %s647, 512, %s3, [#allocation7], 256, 256, 16
    $region29: #{generator_forward.1} parent=1 // pred_fallthru
      _
    // Predicated region
    $region30: #{generator_forward.1} parent=1 // pred_check
      _
    $region31: #{generator_forward.1} parent=1 // pred_check_branch
      %654 = sbr.rel (0) target = $region33
    $region32: #{generator_forward.1} parent=1 // pred_region
      %655 = dma.done [#allocation7], 512
    $region33: #{generator_forward.1} parent=1 // pred_fallthru
      _
    %656 = vsyncpa [#allocation6], 1
    %657 = vsyncpa [#allocation7], 1

</llo_original>
